<compile_context>
chip_gen: v7x
topology: tpu7x:2x2x1
jax: 0.10.0
libtpu: 0.0.40
codegen_flags: <defaults>
</compile_context>

<pallas_src>
import jax
import jax.numpy as jnp
from jax.experimental import pallas as pl
from jax.experimental.pallas import tpu as pltpu

_LANES = 128  # lane-dense output width (output cols zero-padded to this)


def _round_up(n, m):
    return ((n + m - 1) // m) * m


def _hnn_kernel(x_ref,
                w0_ref, b0_ref,
                w1_ref, b1_ref,
                w2_ref, b2_ref,
                wr1_ref, br1_ref,
                wr2_ref, br2_ref,
                wo_ref, bo_ref,
                out_ref):
    """One (TB, F) batch tile: 3x (Linear+ReLU), ResidualBlock, Linear+sigmoid.

    Matmul operands are bf16, accumulation and all elementwise math are f32.
    """
    bf16 = jnp.bfloat16
    f32 = jnp.float32

    # Hoist bias loads once per grid step.
    b0 = b0_ref[...]
    b1 = b1_ref[...]
    b2 = b2_ref[...]
    br1 = br1_ref[...]
    br2 = br2_ref[...]
    bo = bo_ref[...]

    x = x_ref[...]  # bf16 (TB, 64)

    # hidden layer 0: (TB, 64) @ (64, 32) + (1, 32)
    h = jnp.dot(x, w0_ref[...], preferred_element_type=f32) + b0
    h = jnp.maximum(h, 0.0)
    # hidden layer 1
    h = jnp.dot(h.astype(bf16), w1_ref[...], preferred_element_type=f32) + b1
    h = jnp.maximum(h, 0.0)
    # hidden layer 2
    h = jnp.dot(h.astype(bf16), w2_ref[...], preferred_element_type=f32) + b2
    h = jnp.maximum(h, 0.0)

    # ResidualBlock: relu(Linear(relu(Linear(h))) + h)
    r = jnp.dot(h.astype(bf16), wr1_ref[...], preferred_element_type=f32) + br1
    r = jnp.maximum(r, 0.0)
    r = jnp.dot(r.astype(bf16), wr2_ref[...], preferred_element_type=f32) + br2
    r = jnp.maximum(r + h, 0.0)

    # output layer (zero-padded to 128 lanes) + sigmoid ('prefix')
    o = jnp.dot(r.astype(bf16), wo_ref[...], preferred_element_type=f32) + bo
    out_ref[...] = jax.nn.sigmoid(o).astype(out_ref.dtype)


def hnn_forward(x_nchw, params, *, block_b=1024):
    """x_nchw: (B, C, H, W) float32 -> (B, output_units) float32.

    NOTE: for tiny batches (B <~ 64) the plain-XLA path (hnn_reference) beats
    the pallas_call launch overhead; the tiled kernel pays off at large B.
    """
    (w0, b0, w1, b1, w2, b2, wr1, br1, wr2, br2, wo, bo) = params

    B = x_nchw.shape[0]
    x = x_nchw.reshape(B, -1)          # nn.Flatten
    F = x.shape[1]
    out_units = wo.shape[1]

    # Batch tiling: TB multiple of 16 (bf16 sublane packing); pad B up to a
    # multiple of TB in the wrapper, slice the real rows back at the end.
    TB = min(block_b, _round_up(B, 16))
    Bp = _round_up(B, TB)
    if Bp != B:
        x = jnp.pad(x, ((0, Bp - B), (0, 0)))

    # bf16 matmul operands (halves HBM bytes on the dominant x stream);
    # biases stay f32 so elementwise math stays f32.
    x_bf = x.astype(jnp.bfloat16)
    w0b = w0.astype(jnp.bfloat16)
    w1b = w1.astype(jnp.bfloat16)
    w2b = w2.astype(jnp.bfloat16)
    wr1b = wr1.astype(jnp.bfloat16)
    wr2b = wr2.astype(jnp.bfloat16)

    # Lane-dense output: zero-pad the output projection to 128 columns.
    hid = wo.shape[0]
    wo_p = jnp.zeros((hid, _LANES), jnp.bfloat16).at[:, :out_units].set(
        wo.astype(jnp.bfloat16))
    bo_p = jnp.zeros((1, _LANES), jnp.float32).at[:, :out_units].set(
        bo.astype(jnp.float32))

    h0, h1, h2 = w0.shape[1], w1.shape[1], w2.shape[1]

    vmem = pltpu.MemorySpace.VMEM

    def _const(shape):
        # Weights / biases: same block every step -> stay resident in VMEM.
        return pl.BlockSpec(shape, lambda i: (0, 0), memory_space=vmem)

    grid = (Bp // TB,)
    # VMEM per step (TB=1024): x tile 128 KiB (bf16) + out tile 512 KiB (f32),
    # double-buffered ~1.3 MiB + <70 KiB weights -> far below default limits
    # on v5e/v6e/v7x, so no vmem_limit_bytes override is needed.
    out_p = pl.pallas_call(
        _hnn_kernel,
        out_shape=jax.ShapeDtypeStruct((Bp, _LANES), jnp.float32),
        grid=grid,
        in_specs=[
            pl.BlockSpec((TB, F), lambda i: (i, 0), memory_space=vmem),
            _const((F, h0)), _const((1, h0)),
            _const((h0, h1)), _const((1, h1)),
            _const((h1, h2)), _const((1, h2)),
            _const((h2, h2)), _const((1, h2)),
            _const((h2, h2)), _const((1, h2)),
            _const((h2, _LANES)), _const((1, _LANES)),
        ],
        out_specs=pl.BlockSpec((TB, _LANES), lambda i: (i, 0),
                               memory_space=vmem),
        compiler_params=pltpu.CompilerParams(
            dimension_semantics=("parallel",)),
    )(x_bf, w0b, b0, w1b, b1, w2b, b2, wr1b, br1, wr2b, br2, wo_p, bo_p)

    return out_p[:B, :out_units]


def _make_linear_params(key, fan_in, fan_out):
    """sqrt_k init: uniform(-sqrt(1/fan_in), sqrt(1/fan_in)) for W and b.
    Weight stored as (in, out) so the kernel computes x @ W."""
    kw, kb = jax.random.split(key)
    bound = (1.0 / fan_in) ** 0.5
    w = jax.random.uniform(kw, (fan_in, fan_out), jnp.float32, -bound, bound)
    b = jax.random.uniform(kb, (1, fan_out), jnp.float32, -bound, bound)
    return w, b


def make_params(key, input_units=64, hidden=32, output_units=8):
    keys = jax.random.split(key, 6)
    w0, b0 = _make_linear_params(keys[0], input_units, hidden)   # hid[0]
    w1, b1 = _make_linear_params(keys[1], hidden, hidden)        # hid[1]
    w2, b2 = _make_linear_params(keys[2], hidden, hidden)        # hid[2]
    wr1, br1 = _make_linear_params(keys[3], hidden, hidden)      # resblock lin 1
    wr2, br2 = _make_linear_params(keys[4], hidden, hidden)      # resblock lin 2
    wo, bo = _make_linear_params(keys[5], hidden, output_units)  # opt
    return (w0, b0, w1, b1, w2, b2, wr1, br1, wr2, br2, wo, bo)


def hnn_reference(x_nchw, params):
    """Pure-JAX reference with the same bf16-operand / f32-accumulate matmuls."""
    (w0, b0, w1, b1, w2, b2, wr1, br1, wr2, br2, wo, bo) = params
    bf16 = jnp.bfloat16

    def mm(a, w):
        return jnp.dot(a.astype(bf16), w.astype(bf16),
                       preferred_element_type=jnp.float32)

    x = x_nchw.reshape(x_nchw.shape[0], -1)
    h = jax.nn.relu(mm(x, w0) + b0)
    h = jax.nn.relu(mm(h, w1) + b1)
    h = jax.nn.relu(mm(h, w2) + b2)
    r = jax.nn.relu(mm(h, wr1) + br1)
    r = mm(r, wr2) + br2
    r = jax.nn.relu(r + h)
    return jax.nn.sigmoid(mm(r, wo) + bo)


if __name__ == "__main__":
    key = jax.random.PRNGKey(0)
    k_x, k_p = jax.random.split(key)

    # NCHW input: batch=2, channels=4, spatial=4x4 -> flattened input_units=64
    x = jax.random.normal(k_x, (2, 4, 4, 4), jnp.float32)
    params = make_params(k_p, input_units=64, hidden=32, output_units=8)

    out = hnn_forward(x, params)
    out = jax.block_until_ready(out)

    ref = hnn_reference(x, params)
    assert out.shape == (2, 8)
    assert jnp.allclose(out, ref, atol=2e-3, rtol=2e-3), "mismatch vs reference"

    print("KERNEL_OK")
</pallas_src>

<mosaic_0001>
module attributes {stable_mosaic.version = 11 : i64} {
  func.func @_hnn_kernel(%arg0: i32, %arg1: memref<16x64xbf16, #tpu.memory_space<vmem>>, %arg2: memref<64x32xbf16, #tpu.memory_space<vmem>>, %arg3: memref<1x32xf32, #tpu.memory_space<vmem>>, %arg4: memref<32x32xbf16, #tpu.memory_space<vmem>>, %arg5: memref<1x32xf32, #tpu.memory_space<vmem>>, %arg6: memref<32x32xbf16, #tpu.memory_space<vmem>>, %arg7: memref<1x32xf32, #tpu.memory_space<vmem>>, %arg8: memref<32x32xbf16, #tpu.memory_space<vmem>>, %arg9: memref<1x32xf32, #tpu.memory_space<vmem>>, %arg10: memref<32x32xbf16, #tpu.memory_space<vmem>>, %arg11: memref<1x32xf32, #tpu.memory_space<vmem>>, %arg12: memref<32x128xbf16, #tpu.memory_space<vmem>>, %arg13: memref<1x128xf32, #tpu.memory_space<vmem>>, %arg14: memref<16x128xf32, #tpu.memory_space<vmem>>) attributes {dimension_semantics = [#tpu.dimension_semantics<parallel>], iteration_bounds = array<i64: 1>, scalar_prefetch = 0 : i64, scratch_operands = 0 : i64, tpu.core_type = #tpu.core_type<tc>, window_params = [{transform_indices = @transform_0, window_bounds = array<i64: 16, 64>}, {pipeline_mode = #tpu.pipeline_mode<synchronous>, transform_indices = @transform_1, window_bounds = array<i64: 64, 32>}, {pipeline_mode = #tpu.pipeline_mode<synchronous>, transform_indices = @transform_2, window_bounds = array<i64: 1, 32>}, {pipeline_mode = #tpu.pipeline_mode<synchronous>, transform_indices = @transform_3, window_bounds = array<i64: 32, 32>}, {pipeline_mode = #tpu.pipeline_mode<synchronous>, transform_indices = @transform_4, window_bounds = array<i64: 1, 32>}, {pipeline_mode = #tpu.pipeline_mode<synchronous>, transform_indices = @transform_5, window_bounds = array<i64: 32, 32>}, {pipeline_mode = #tpu.pipeline_mode<synchronous>, transform_indices = @transform_6, window_bounds = array<i64: 1, 32>}, {pipeline_mode = #tpu.pipeline_mode<synchronous>, transform_indices = @transform_7, window_bounds = array<i64: 32, 32>}, {pipeline_mode = #tpu.pipeline_mode<synchronous>, transform_indices = @transform_8, window_bounds = array<i64: 1, 32>}, {pipeline_mode = #tpu.pipeline_mode<synchronous>, transform_indices = @transform_9, window_bounds = array<i64: 32, 32>}, {pipeline_mode = #tpu.pipeline_mode<synchronous>, transform_indices = @transform_10, window_bounds = array<i64: 1, 32>}, {pipeline_mode = #tpu.pipeline_mode<synchronous>, transform_indices = @transform_11, window_bounds = array<i64: 32, 128>}, {pipeline_mode = #tpu.pipeline_mode<synchronous>, transform_indices = @transform_12, window_bounds = array<i64: 1, 128>}, {transform_indices = @transform_13, window_bounds = array<i64: 16, 128>}]} {
    %c0 = arith.constant 0 : index
    %c0_0 = arith.constant 0 : index
    %0 = vector.load %arg3[%c0, %c0_0] : memref<1x32xf32, #tpu.memory_space<vmem>>, vector<1x32xf32>
    %c0_1 = arith.constant 0 : index
    %c0_2 = arith.constant 0 : index
    %1 = vector.load %arg5[%c0_1, %c0_2] : memref<1x32xf32, #tpu.memory_space<vmem>>, vector<1x32xf32>
    %c0_3 = arith.constant 0 : index
    %c0_4 = arith.constant 0 : index
    %2 = vector.load %arg7[%c0_3, %c0_4] : memref<1x32xf32, #tpu.memory_space<vmem>>, vector<1x32xf32>
    %c0_5 = arith.constant 0 : index
    %c0_6 = arith.constant 0 : index
    %3 = vector.load %arg9[%c0_5, %c0_6] : memref<1x32xf32, #tpu.memory_space<vmem>>, vector<1x32xf32>
    %c0_7 = arith.constant 0 : index
    %c0_8 = arith.constant 0 : index
    %4 = vector.load %arg11[%c0_7, %c0_8] : memref<1x32xf32, #tpu.memory_space<vmem>>, vector<1x32xf32>
    %c0_9 = arith.constant 0 : index
    %c0_10 = arith.constant 0 : index
    %5 = vector.load %arg13[%c0_9, %c0_10] : memref<1x128xf32, #tpu.memory_space<vmem>>, vector<1x128xf32>
    %c0_11 = arith.constant 0 : index
    %c0_12 = arith.constant 0 : index
    %6 = vector.load %arg1[%c0_11, %c0_12] : memref<16x64xbf16, #tpu.memory_space<vmem>>, vector<16x64xbf16>
    %c0_13 = arith.constant 0 : index
    %c0_14 = arith.constant 0 : index
    %7 = vector.load %arg2[%c0_13, %c0_14] : memref<64x32xbf16, #tpu.memory_space<vmem>>, vector<64x32xbf16>
    %cst = arith.constant dense<0.000000e+00> : vector<16x32xf32>
    %8 = tpu.matmul %6, %7, %cst {dimension_numbers = #tpu.dot_dimension_numbers<[1], [0], [0], [1], [0, 0, 1, 1], [], []>} : vector<16x64xbf16>, vector<64x32xbf16>, vector<16x32xf32> -> vector<16x32xf32>
    %9 = vector.broadcast %0 : vector<1x32xf32> to vector<16x32xf32>
    %10 = arith.addf %8, %9 : vector<16x32xf32>
    %cst_15 = arith.constant 0.000000e+00 : f32
    %11 = vector.broadcast %cst_15 : f32 to vector<16x32xf32>
    %12 = arith.maximumf %10, %11 : vector<16x32xf32>
    %13 = arith.truncf %12 : vector<16x32xf32> to vector<16x32xbf16>
    %c0_16 = arith.constant 0 : index
    %c0_17 = arith.constant 0 : index
    %14 = vector.load %arg4[%c0_16, %c0_17] : memref<32x32xbf16, #tpu.memory_space<vmem>>, vector<32x32xbf16>
    %cst_18 = arith.constant dense<0.000000e+00> : vector<16x32xf32>
    %15 = tpu.matmul %13, %14, %cst_18 {dimension_numbers = #tpu.dot_dimension_numbers<[1], [0], [0], [1], [0, 0, 1, 1], [], []>} : vector<16x32xbf16>, vector<32x32xbf16>, vector<16x32xf32> -> vector<16x32xf32>
    %16 = vector.broadcast %1 : vector<1x32xf32> to vector<16x32xf32>
    %17 = arith.addf %15, %16 : vector<16x32xf32>
    %cst_19 = arith.constant 0.000000e+00 : f32
    %18 = vector.broadcast %cst_19 : f32 to vector<16x32xf32>
    %19 = arith.maximumf %17, %18 : vector<16x32xf32>
    %20 = arith.truncf %19 : vector<16x32xf32> to vector<16x32xbf16>
    %c0_20 = arith.constant 0 : index
    %c0_21 = arith.constant 0 : index
    %21 = vector.load %arg6[%c0_20, %c0_21] : memref<32x32xbf16, #tpu.memory_space<vmem>>, vector<32x32xbf16>
    %cst_22 = arith.constant dense<0.000000e+00> : vector<16x32xf32>
    %22 = tpu.matmul %20, %21, %cst_22 {dimension_numbers = #tpu.dot_dimension_numbers<[1], [0], [0], [1], [0, 0, 1, 1], [], []>} : vector<16x32xbf16>, vector<32x32xbf16>, vector<16x32xf32> -> vector<16x32xf32>
    %23 = vector.broadcast %2 : vector<1x32xf32> to vector<16x32xf32>
    %24 = arith.addf %22, %23 : vector<16x32xf32>
    %cst_23 = arith.constant 0.000000e+00 : f32
    %25 = vector.broadcast %cst_23 : f32 to vector<16x32xf32>
    %26 = arith.maximumf %24, %25 : vector<16x32xf32>
    %27 = arith.truncf %26 : vector<16x32xf32> to vector<16x32xbf16>
    %c0_24 = arith.constant 0 : index
    %c0_25 = arith.constant 0 : index
    %28 = vector.load %arg8[%c0_24, %c0_25] : memref<32x32xbf16, #tpu.memory_space<vmem>>, vector<32x32xbf16>
    %cst_26 = arith.constant dense<0.000000e+00> : vector<16x32xf32>
    %29 = tpu.matmul %27, %28, %cst_26 {dimension_numbers = #tpu.dot_dimension_numbers<[1], [0], [0], [1], [0, 0, 1, 1], [], []>} : vector<16x32xbf16>, vector<32x32xbf16>, vector<16x32xf32> -> vector<16x32xf32>
    %30 = vector.broadcast %3 : vector<1x32xf32> to vector<16x32xf32>
    %31 = arith.addf %29, %30 : vector<16x32xf32>
    %cst_27 = arith.constant 0.000000e+00 : f32
    %32 = vector.broadcast %cst_27 : f32 to vector<16x32xf32>
    %33 = arith.maximumf %31, %32 : vector<16x32xf32>
    %34 = arith.truncf %33 : vector<16x32xf32> to vector<16x32xbf16>
    %c0_28 = arith.constant 0 : index
    %c0_29 = arith.constant 0 : index
    %35 = vector.load %arg10[%c0_28, %c0_29] : memref<32x32xbf16, #tpu.memory_space<vmem>>, vector<32x32xbf16>
    %cst_30 = arith.constant dense<0.000000e+00> : vector<16x32xf32>
    %36 = tpu.matmul %34, %35, %cst_30 {dimension_numbers = #tpu.dot_dimension_numbers<[1], [0], [0], [1], [0, 0, 1, 1], [], []>} : vector<16x32xbf16>, vector<32x32xbf16>, vector<16x32xf32> -> vector<16x32xf32>
    %37 = vector.broadcast %4 : vector<1x32xf32> to vector<16x32xf32>
    %38 = arith.addf %36, %37 : vector<16x32xf32>
    %39 = arith.addf %38, %26 : vector<16x32xf32>
    %cst_31 = arith.constant 0.000000e+00 : f32
    %40 = vector.broadcast %cst_31 : f32 to vector<16x32xf32>
    %41 = arith.maximumf %39, %40 : vector<16x32xf32>
    %42 = arith.truncf %41 : vector<16x32xf32> to vector<16x32xbf16>
    %c0_32 = arith.constant 0 : index
    %c0_33 = arith.constant 0 : index
    %43 = vector.load %arg12[%c0_32, %c0_33] : memref<32x128xbf16, #tpu.memory_space<vmem>>, vector<32x128xbf16>
    %cst_34 = arith.constant dense<0.000000e+00> : vector<16x128xf32>
    %44 = tpu.matmul %42, %43, %cst_34 {dimension_numbers = #tpu.dot_dimension_numbers<[1], [0], [0], [1], [0, 0, 1, 1], [], []>} : vector<16x32xbf16>, vector<32x128xbf16>, vector<16x128xf32> -> vector<16x128xf32>
    %45 = vector.broadcast %5 : vector<1x128xf32> to vector<16x128xf32>
    %46 = arith.addf %44, %45 : vector<16x128xf32>
    %47 = arith.negf %46 : vector<16x128xf32>
    %48 = math.exp %47 : vector<16x128xf32>
    %cst_35 = arith.constant 1.000000e+00 : f32
    %49 = vector.broadcast %cst_35 : f32 to vector<16x128xf32>
    %50 = arith.addf %49, %48 : vector<16x128xf32>
    %51 = arith.divf %49, %50 : vector<16x128xf32>
    %c0_36 = arith.constant 0 : index
    %c0_37 = arith.constant 0 : index
    %52 = vector.load %arg14[%c0_36, %c0_37] : memref<16x128xf32, #tpu.memory_space<vmem>>, vector<16x128xf32>
    tpu.vector_store %arg14[%c0_36, %c0_37], %51 {strides = array<i32>} : memref<16x128xf32, #tpu.memory_space<vmem>>, vector<16x128xf32>,
    return
  }
  func.func @transform_0(%arg0: i32) -> (i32, i32) {
    %c0_i32 = arith.constant 0 : i32
    %c0_i32_0 = arith.constant 0 : i32
    return %arg0, %c0_i32 : i32, i32
  }
  func.func @transform_1(%arg0: i32) -> (i32, i32) {
    %c0_i32 = arith.constant 0 : i32
    %c0_i32_0 = arith.constant 0 : i32
    %c0_i32_1 = arith.constant 0 : i32
    return %c0_i32, %c0_i32_0 : i32, i32
  }
  func.func @transform_2(%arg0: i32) -> (i32, i32) {
    %c0_i32 = arith.constant 0 : i32
    %c0_i32_0 = arith.constant 0 : i32
    %c0_i32_1 = arith.constant 0 : i32
    return %c0_i32, %c0_i32_0 : i32, i32
  }
  func.func @transform_3(%arg0: i32) -> (i32, i32) {
    %c0_i32 = arith.constant 0 : i32
    %c0_i32_0 = arith.constant 0 : i32
    %c0_i32_1 = arith.constant 0 : i32
    return %c0_i32, %c0_i32_0 : i32, i32
  }
  func.func @transform_4(%arg0: i32) -> (i32, i32) {
    %c0_i32 = arith.constant 0 : i32
    %c0_i32_0 = arith.constant 0 : i32
    %c0_i32_1 = arith.constant 0 : i32
    return %c0_i32, %c0_i32_0 : i32, i32
  }
  func.func @transform_5(%arg0: i32) -> (i32, i32) {
    %c0_i32 = arith.constant 0 : i32
    %c0_i32_0 = arith.constant 0 : i32
    %c0_i32_1 = arith.constant 0 : i32
    return %c0_i32, %c0_i32_0 : i32, i32
  }
  func.func @transform_6(%arg0: i32) -> (i32, i32) {
    %c0_i32 = arith.constant 0 : i32
    %c0_i32_0 = arith.constant 0 : i32
    %c0_i32_1 = arith.constant 0 : i32
    return %c0_i32, %c0_i32_0 : i32, i32
  }
  func.func @transform_7(%arg0: i32) -> (i32, i32) {
    %c0_i32 = arith.constant 0 : i32
    %c0_i32_0 = arith.constant 0 : i32
    %c0_i32_1 = arith.constant 0 : i32
    return %c0_i32, %c0_i32_0 : i32, i32
  }
  func.func @transform_8(%arg0: i32) -> (i32, i32) {
    %c0_i32 = arith.constant 0 : i32
    %c0_i32_0 = arith.constant 0 : i32
    %c0_i32_1 = arith.constant 0 : i32
    return %c0_i32, %c0_i32_0 : i32, i32
  }
  func.func @transform_9(%arg0: i32) -> (i32, i32) {
    %c0_i32 = arith.constant 0 : i32
    %c0_i32_0 = arith.constant 0 : i32
    %c0_i32_1 = arith.constant 0 : i32
    return %c0_i32, %c0_i32_0 : i32, i32
  }
  func.func @transform_10(%arg0: i32) -> (i32, i32) {
    %c0_i32 = arith.constant 0 : i32
    %c0_i32_0 = arith.constant 0 : i32
    %c0_i32_1 = arith.constant 0 : i32
    return %c0_i32, %c0_i32_0 : i32, i32
  }
  func.func @transform_11(%arg0: i32) -> (i32, i32) {
    %c0_i32 = arith.constant 0 : i32
    %c0_i32_0 = arith.constant 0 : i32
    %c0_i32_1 = arith.constant 0 : i32
    return %c0_i32, %c0_i32_0 : i32, i32
  }
  func.func @transform_12(%arg0: i32) -> (i32, i32) {
    %c0_i32 = arith.constant 0 : i32
    %c0_i32_0 = arith.constant 0 : i32
    %c0_i32_1 = arith.constant 0 : i32
    return %c0_i32, %c0_i32_0 : i32, i32
  }
  func.func @transform_13(%arg0: i32) -> (i32, i32) {
    %c0_i32 = arith.constant 0 : i32
    %c0_i32_0 = arith.constant 0 : i32
    return %arg0, %c0_i32 : i32, i32
  }
}

</mosaic_0001>

<llo_original>
// kernel: tpu_custom_call.1
$region0: #{tpu_custom_call.1}
  #allocation0 [shape = 'u32[]', space=smem, size = 0x4, offset = 0x4, fixed_abs, tag = 'smem constant byte address 0x4 - core index']
  #allocation1 [shape = 'u32[144,128]{1,0:T(1,128)}', space=vmem, size = 0x12000, scoped, tag = 'internal scratch']
  %s0 = inlined_call_operand.hbm [shape: bf16[16,64], index: 0, kind: input, shape index: {}]
  %s1 = inlined_call_operand.vmem [shape: bf16[64,32], index: 1, kind: input, shape index: {}]
  %s2 = inlined_call_operand.vmem [shape: f32[1,32], index: 2, kind: input, shape index: {}]
  %s3 = inlined_call_operand.vmem [shape: bf16[32,32], index: 3, kind: input, shape index: {}]
  %s4 = inlined_call_operand.vmem [shape: f32[1,32], index: 4, kind: input, shape index: {}]
  %s5 = inlined_call_operand.vmem [shape: bf16[32,32], index: 5, kind: input, shape index: {}]
  %s6 = inlined_call_operand.hbm [shape: f32[1,32], index: 6, kind: input, shape index: {}]
  %s7 = inlined_call_operand.vmem [shape: bf16[32,32], index: 7, kind: input, shape index: {}]
  %s8 = inlined_call_operand.hbm [shape: f32[1,32], index: 8, kind: input, shape index: {}]
  %s9 = inlined_call_operand.vmem [shape: bf16[32,32], index: 9, kind: input, shape index: {}]
  %s10 = inlined_call_operand.vmem [shape: f32[1,32], index: 10, kind: input, shape index: {}]
  %s11 = inlined_call_operand.vmem [shape: bf16[32,128], index: 11, kind: input, shape index: {}]
  %s12 = inlined_call_operand.vmem [shape: f32[1,128], index: 12, kind: input, shape index: {}]
  %s13 = inlined_call_operand.hbm [shape: f32[16,128], index: 13, kind: output, shape index: {}]
  %s14 = sld [smem:[#allocation0]]
  $region74: #{tpu_custom_call.1} parent=0
    _
  %s16 = ssub.s32 1, %s14
  %s17 = scalar_select 0, %s16, %s14
  $region1: #{tpu_custom_call.1} parent=0
    #allocation2 [shape = 'u8[4096]{0}', space=vmem, size = 0x1000, scoped, tag = 'input window, operand 0, single buffered']
    #allocation3 [shape = 's32[1]{0}', space=sflag, size = 0x4, scoped, tag = 'scoped memory for tpu_custom_call.1']
    #allocation4 [shape = 's32[1]{0}', space=sflag, size = 0x4, scoped, tag = 'scoped memory for tpu_custom_call.1']
    #allocation5 [shape = 'u8[512]{0}', space=vmem, size = 0x400, scoped, tag = 'input window, operand 6, single buffered']
    #allocation6 [shape = 's32[1]{0}', space=sflag, size = 0x4, scoped, tag = 'scoped memory for tpu_custom_call.1']
    #allocation7 [shape = 'u8[512]{0}', space=vmem, size = 0x400, scoped, tag = 'input window, operand 8, single buffered']
    #allocation8 [shape = 'u8[8192]{0}', space=vmem, size = 0x2000, scoped, tag = 'output window, operand 0, single buffered']
    %18 = vsyncpa [#allocation3], 0
    %19 = vsyncpa [#allocation6], 0
    %20 = vsyncpa [#allocation4], 0
    // Predicated region
    $region2: #{tpu_custom_call.1} parent=1 // pred_check
      _
    $region3: #{tpu_custom_call.1} parent=1 // pred_check_branch
      %22 = sbr.rel (0) target = $region5
    $region4: #{tpu_custom_call.1} parent=1 // pred_region
      %s24 = ssub.s32 128, 128
      %25 = vsyncadd [#allocation3], %s24
      %s26 = sshll.u32 [#allocation2], 4
      %s27 = int_to_ptr.vmem [resolvable:$true] %s26
      %32 = dma.hbm_to_vmem [thread:$0]  %s0, 128, %s27, [#allocation3], 64, 64, 4
    $region5: #{tpu_custom_call.1} parent=1 // pred_fallthru
      _
    // Predicated region
    $region6: #{tpu_custom_call.1} parent=1 // pred_check
      _
    $region7: #{tpu_custom_call.1} parent=1 // pred_check_branch
      %34 = sbr.rel (0) target = $region9
    $region8: #{tpu_custom_call.1} parent=1 // pred_region
      _
    $region9: #{tpu_custom_call.1} parent=1 // pred_fallthru
      _
    // Predicated region
    $region10: #{tpu_custom_call.1} parent=1 // pred_check
      _
    $region11: #{tpu_custom_call.1} parent=1 // pred_check_branch
      %36 = sbr.rel (0) target = $region13
    $region12: #{tpu_custom_call.1} parent=1 // pred_region
      _
    $region13: #{tpu_custom_call.1} parent=1 // pred_fallthru
      _
    // Predicated region
    $region14: #{tpu_custom_call.1} parent=1 // pred_check
      _
    $region15: #{tpu_custom_call.1} parent=1 // pred_check_branch
      %38 = sbr.rel (0) target = $region17
    $region16: #{tpu_custom_call.1} parent=1 // pred_region
      _
    $region17: #{tpu_custom_call.1} parent=1 // pred_fallthru
      _
    // Predicated region
    $region18: #{tpu_custom_call.1} parent=1 // pred_check
      _
    $region19: #{tpu_custom_call.1} parent=1 // pred_check_branch
      %40 = sbr.rel (0) target = $region21
    $region20: #{tpu_custom_call.1} parent=1 // pred_region
      _
    $region21: #{tpu_custom_call.1} parent=1 // pred_fallthru
      _
    // Predicated region
    $region22: #{tpu_custom_call.1} parent=1 // pred_check
      _
    $region23: #{tpu_custom_call.1} parent=1 // pred_check_branch
      %42 = sbr.rel (0) target = $region25
    $region24: #{tpu_custom_call.1} parent=1 // pred_region
      _
    $region25: #{tpu_custom_call.1} parent=1 // pred_fallthru
      _
    // Predicated region
    $region26: #{tpu_custom_call.1} parent=1 // pred_check
      _
    $region27: #{tpu_custom_call.1} parent=1 // pred_check_branch
      %44 = sbr.rel (0) target = $region29
    $region28: #{tpu_custom_call.1} parent=1 // pred_region
      %s46 = ssub.s32 16, 16
      %47 = vsyncadd [#allocation6], %s46
      %s49 = sshll.u32 [#allocation5], 4
      %s50 = int_to_ptr.vmem [resolvable:$true] %s49
      %52 = dma.hbm_to_vmem [thread:$0]  %s6, 16, %s50, [#allocation6]
    $region29: #{tpu_custom_call.1} parent=1 // pred_fallthru
      _
    // Predicated region
    $region30: #{tpu_custom_call.1} parent=1 // pred_check
      _
    $region31: #{tpu_custom_call.1} parent=1 // pred_check_branch
      %54 = sbr.rel (0) target = $region33
    $region32: #{tpu_custom_call.1} parent=1 // pred_region
      _
    $region33: #{tpu_custom_call.1} parent=1 // pred_fallthru
      _
    // Predicated region
    $region34: #{tpu_custom_call.1} parent=1 // pred_check
      _
    $region35: #{tpu_custom_call.1} parent=1 // pred_check_branch
      %56 = sbr.rel (0) target = $region37
    $region36: #{tpu_custom_call.1} parent=1 // pred_region
      %s58 = ssub.s32 16, 16
      %59 = vsyncadd [#allocation6], %s58
      %s61 = sshll.u32 [#allocation7], 4
      %s62 = int_to_ptr.vmem [resolvable:$true] %s61
      %64 = dma.hbm_to_vmem [thread:$0]  %s8, 16, %s62, [#allocation6]
    $region37: #{tpu_custom_call.1} parent=1 // pred_fallthru
      _
    // Predicated region
    $region38: #{tpu_custom_call.1} parent=1 // pred_check
      _
    $region39: #{tpu_custom_call.1} parent=1 // pred_check_branch
      %66 = sbr.rel (0) target = $region41
    $region40: #{tpu_custom_call.1} parent=1 // pred_region
      _
    $region41: #{tpu_custom_call.1} parent=1 // pred_fallthru
      _
    // Predicated region
    $region42: #{tpu_custom_call.1} parent=1 // pred_check
      _
    $region43: #{tpu_custom_call.1} parent=1 // pred_check_branch
      %68 = sbr.rel (0) target = $region45
    $region44: #{tpu_custom_call.1} parent=1 // pred_region
      _
    $region45: #{tpu_custom_call.1} parent=1 // pred_fallthru
      _
    // Predicated region
    $region46: #{tpu_custom_call.1} parent=1 // pred_check
      _
    $region47: #{tpu_custom_call.1} parent=1 // pred_check_branch
      %70 = sbr.rel (0) target = $region49
    $region48: #{tpu_custom_call.1} parent=1 // pred_region
      _
    $region49: #{tpu_custom_call.1} parent=1 // pred_fallthru
      _
    // Predicated region
    $region50: #{tpu_custom_call.1} parent=1 // pred_check
      _
    $region51: #{tpu_custom_call.1} parent=1 // pred_check_branch
      %72 = sbr.rel (0) target = $region53
    $region52: #{tpu_custom_call.1} parent=1 // pred_region
      _
    $region53: #{tpu_custom_call.1} parent=1 // pred_fallthru
      _
    // Predicated region
    $region54: #{tpu_custom_call.1} parent=1 // pred_check
      _
    $region55: #{tpu_custom_call.1} parent=1 // pred_check_branch
      %74 = sbr.rel (0) target = $region57
    $region56: #{tpu_custom_call.1} parent=1 // pred_region
      %75 = dma.done [#allocation3], 128
    $region57: #{tpu_custom_call.1} parent=1 // pred_fallthru
      _
    // Predicated region
    $region58: #{tpu_custom_call.1} parent=1 // pred_check
      _
    $region59: #{tpu_custom_call.1} parent=1 // pred_check_branch
      %77 = sbr.rel (0) target = $region61
    $region60: #{tpu_custom_call.1} parent=1 // pred_region
      %78 = dma.done [#allocation6], 16
    $region61: #{tpu_custom_call.1} parent=1 // pred_fallthru
      _
    // Predicated region
    $region62: #{tpu_custom_call.1} parent=1 // pred_check
      _
    $region63: #{tpu_custom_call.1} parent=1 // pred_check_branch
      %80 = sbr.rel (0) target = $region65
    $region64: #{tpu_custom_call.1} parent=1 // pred_region
      %81 = dma.done [#allocation6], 16
    $region65: #{tpu_custom_call.1} parent=1 // pred_fallthru
      _
    %v83 = vld [vmem:[%s2] sm:$0x1]
    %v84 = vld [vmem:[%s4] sm:$0x1]
    %v85 = vld [vmem:[#allocation5] sm:$0x1]
    %v86 = vld [vmem:[#allocation7] sm:$0x1]
    %v87 = vld [vmem:[%s10] sm:$0x1]
    %v88 = vld [vmem:[%s12] sm:$0x1]
    %v89 = vld [vmem:[#allocation2] sm:$0xf]
    %v90 = vld [vmem:[#allocation2 + $0x4] sm:$0xf]
    %v91 = vld [vmem:[%s1] sm:$0xf]
    %v92 = vld [vmem:[%s1 + $0x4] sm:$0xf]
    %v93 = vld [vmem:[%s1 + $0x8] sm:$0xf]
    %v94 = vld [vmem:[%s1 + $0xc] sm:$0xf]
    %v95 = vld [vmem:[%s1 + $0x10] sm:$0xf]
    %v96 = vld [vmem:[%s1 + $0x14] sm:$0xf]
    %v97 = vld [vmem:[%s1 + $0x18] sm:$0xf]
    %v98 = vld [vmem:[%s1 + $0x1c] sm:$0xf]
    %v100 = vlaneseq
    %v101 = vshrl.u32 %v100, 7
    %v102 = vsub.s32 0, %v101
    %v103 = vrot.slane %v83, %v102
    %v107 = vunpack.c.l.b16 %v89
    %v108 = vunpack.c.l.b16 %v90
    %v109 = vpack.c.b16 %v108, %v107
    %v118 = vunpack.c.l.b16 %v91
    %v119 = vunpack.c.l.b16 %v92
    %v120 = vunpack.c.l.b16 %v93
    %v121 = vunpack.c.l.b16 %v94
    %v122 = vunpack.c.l.b16 %v95
    %v123 = vunpack.c.l.b16 %v96
    %v124 = vunpack.c.l.b16 %v97
    %v125 = vunpack.c.l.b16 %v98
    %v126 = vpack.c.b16 %v119, %v118
    %v127 = vpack.c.b16 %v121, %v120
    %v128 = vpack.c.b16 %v123, %v122
    %v129 = vpack.c.b16 %v125, %v124
    %vm134 = vcmask 523264
    %v136 = vsel %vm134, %v109, 0
    %138 = vmatprep.subr.bf16.mxu0 0
    %139 = vmatpush1.bf16.msra.mxu0 %v126
    %140 = vmatprep.subr.bf16.mxu0 0
    %141 = vmatpush1.bf16.msra.mxu0 %v127
    %142 = vmatprep.subr.bf16.mxu0 0
    %143 = vmatpush1.bf16.msra.mxu0 %v128
    %144 = vmatprep.subr.bf16.mxu0 0
    %145 = vmatpush1.bf16.msra.mxu0 %v129
    %146 = vmatprep.subr.bf16.mxu0 0
    %147 = vmatpush1.bf16.msra.mxu0 0
    %148 = vmatprep.subr.bf16.mxu0 0
    %149 = vmatpush1.bf16.msra.mxu0 0
    %150 = vmatprep.subr.bf16.mxu0 0
    %151 = vmatpush1.bf16.msra.mxu0 0
    %152 = vmatprep.subr.bf16.mxu0 0
    %153 = vmatpush1.bf16.msra.mxu0 0
    %154 = vmatprep.subr.bf16.mxu0 0
    %155 = vmatpush1.bf16.msra.mxu0 0
    %156 = vmatprep.subr.bf16.mxu0 0
    %157 = vmatpush1.bf16.msra.mxu0 0
    %158 = vmatprep.subr.bf16.mxu0 0
    %159 = vmatpush1.bf16.msra.mxu0 0
    %160 = vmatprep.subr.bf16.mxu0 0
    %161 = vmatpush1.bf16.msra.mxu0 0
    %162 = vmatprep.subr.bf16.mxu0 0
    %163 = vmatpush1.bf16.msra.mxu0 0
    %164 = vmatprep.subr.bf16.mxu0 0
    %165 = vmatpush1.bf16.msra.mxu0 0
    %166 = vmatprep.subr.bf16.mxu0 0
    %167 = vmatpush1.bf16.msra.mxu0 0
    %168 = vmatprep.subr.bf16.mxu0 0
    %169 = vmatpush1.bf16.msra.mxu0 0
    %170 = vmatprep.mubr.bf16.mxu0 0
    %171 = vmatmul.mubr.bf16.gmra.mrb[0].mxu0 %v136
    %v172 = vpop.f32.mrb[0].mxu0
    %v173 = vadd.f32 %v103, %v172
    %v174 = vpop.f32.mrb[0].mxu0
    %v175 = vpop.f32.mrb[0].mxu0
    %v176 = vadd.f32 %v103, %v175
    %v177 = vpop.f32.mrb[0].mxu0
    %178 = vdwg.mxu0
    %v179 = vmax.f32 %v173, 0.0
    %v180 = vmax.f32 %v176, 0.0
    %v181 = vpack.c.bf16 %v180, %v179
    %v182 = vld [vmem:[%s3] sm:$0xf]
    %v183 = vld [vmem:[%s3 + $0x4] sm:$0xf]
    %v184 = vld [vmem:[%s3 + $0x8] sm:$0xf]
    %v185 = vld [vmem:[%s3 + $0xc] sm:$0xf]
    %v187 = vlaneseq
    %v188 = vshrl.u32 %v187, 7
    %v189 = vsub.s32 0, %v188
    %v190 = vrot.slane %v84, %v189
    %v196 = vunpack.c.l.b16 %v182
    %v197 = vunpack.c.l.b16 %v183
    %v198 = vunpack.c.l.b16 %v184
    %v199 = vunpack.c.l.b16 %v185
    %v200 = vpack.c.b16 %v197, %v196
    %v201 = vpack.c.b16 %v199, %v198
    %vm204 = vcmask 261120
    %v206 = vsel %vm204, %v181, 0
    %208 = vmatprep.subr.bf16.mxu0 0
    %209 = vmatpush1.bf16.msra.mxu0 %v200
    %210 = vmatprep.subr.bf16.mxu0 0
    %211 = vmatpush1.bf16.msra.mxu0 %v201
    %212 = vmatprep.subr.bf16.mxu0 0
    %213 = vmatpush1.bf16.msra.mxu0 0
    %214 = vmatprep.subr.bf16.mxu0 0
    %215 = vmatpush1.bf16.msra.mxu0 0
    %216 = vmatprep.subr.bf16.mxu0 0
    %217 = vmatpush1.bf16.msra.mxu0 0
    %218 = vmatprep.subr.bf16.mxu0 0
    %219 = vmatpush1.bf16.msra.mxu0 0
    %220 = vmatprep.subr.bf16.mxu0 0
    %221 = vmatpush1.bf16.msra.mxu0 0
    %222 = vmatprep.subr.bf16.mxu0 0
    %223 = vmatpush1.bf16.msra.mxu0 0
    %224 = vmatprep.subr.bf16.mxu0 0
    %225 = vmatpush1.bf16.msra.mxu0 0
    %226 = vmatprep.subr.bf16.mxu0 0
    %227 = vmatpush1.bf16.msra.mxu0 0
    %228 = vmatprep.subr.bf16.mxu0 0
    %229 = vmatpush1.bf16.msra.mxu0 0
    %230 = vmatprep.subr.bf16.mxu0 0
    %231 = vmatpush1.bf16.msra.mxu0 0
    %232 = vmatprep.subr.bf16.mxu0 0
    %233 = vmatpush1.bf16.msra.mxu0 0
    %234 = vmatprep.subr.bf16.mxu0 0
    %235 = vmatpush1.bf16.msra.mxu0 0
    %236 = vmatprep.subr.bf16.mxu0 0
    %237 = vmatpush1.bf16.msra.mxu0 0
    %238 = vmatprep.subr.bf16.mxu0 0
    %239 = vmatpush1.bf16.msra.mxu0 0
    %240 = vmatprep.mubr.bf16.mxu0 0
    %241 = vmatmul.mubr.bf16.gmra.mrb[0].mxu0 %v206
    %v242 = vpop.f32.mrb[0].mxu0
    %v243 = vadd.f32 %v190, %v242
    %v244 = vpop.f32.mrb[0].mxu0
    %v245 = vpop.f32.mrb[0].mxu0
    %v246 = vadd.f32 %v190, %v245
    %v247 = vpop.f32.mrb[0].mxu0
    %248 = vdwg.mxu0
    %v249 = vmax.f32 %v243, 0.0
    %v250 = vmax.f32 %v246, 0.0
    %v251 = vpack.c.bf16 %v250, %v249
    %v252 = vld [vmem:[%s5] sm:$0xf]
    %v253 = vld [vmem:[%s5 + $0x4] sm:$0xf]
    %v254 = vld [vmem:[%s5 + $0x8] sm:$0xf]
    %v255 = vld [vmem:[%s5 + $0xc] sm:$0xf]
    %v257 = vlaneseq
    %v258 = vshrl.u32 %v257, 7
    %v259 = vsub.s32 0, %v258
    %v260 = vrot.slane %v85, %v259
    %v266 = vunpack.c.l.b16 %v252
    %v267 = vunpack.c.l.b16 %v253
    %v268 = vunpack.c.l.b16 %v254
    %v269 = vunpack.c.l.b16 %v255
    %v270 = vpack.c.b16 %v267, %v266
    %v271 = vpack.c.b16 %v269, %v268
    %v275 = vsel %vm204, %v251, 0
    %277 = vmatprep.subr.bf16.mxu0 0
    %278 = vmatpush1.bf16.msra.mxu0 %v270
    %279 = vmatprep.subr.bf16.mxu0 0
    %280 = vmatpush1.bf16.msra.mxu0 %v271
    %281 = vmatprep.subr.bf16.mxu0 0
    %282 = vmatpush1.bf16.msra.mxu0 0
    %283 = vmatprep.subr.bf16.mxu0 0
    %284 = vmatpush1.bf16.msra.mxu0 0
    %285 = vmatprep.subr.bf16.mxu0 0
    %286 = vmatpush1.bf16.msra.mxu0 0
    %287 = vmatprep.subr.bf16.mxu0 0
    %288 = vmatpush1.bf16.msra.mxu0 0
    %289 = vmatprep.subr.bf16.mxu0 0
    %290 = vmatpush1.bf16.msra.mxu0 0
    %291 = vmatprep.subr.bf16.mxu0 0
    %292 = vmatpush1.bf16.msra.mxu0 0
    %293 = vmatprep.subr.bf16.mxu0 0
    %294 = vmatpush1.bf16.msra.mxu0 0
    %295 = vmatprep.subr.bf16.mxu0 0
    %296 = vmatpush1.bf16.msra.mxu0 0
    %297 = vmatprep.subr.bf16.mxu0 0
    %298 = vmatpush1.bf16.msra.mxu0 0
    %299 = vmatprep.subr.bf16.mxu0 0
    %300 = vmatpush1.bf16.msra.mxu0 0
    %301 = vmatprep.subr.bf16.mxu0 0
    %302 = vmatpush1.bf16.msra.mxu0 0
    %303 = vmatprep.subr.bf16.mxu0 0
    %304 = vmatpush1.bf16.msra.mxu0 0
    %305 = vmatprep.subr.bf16.mxu0 0
    %306 = vmatpush1.bf16.msra.mxu0 0
    %307 = vmatprep.subr.bf16.mxu0 0
    %308 = vmatpush1.bf16.msra.mxu0 0
    %309 = vmatprep.mubr.bf16.mxu0 0
    %310 = vmatmul.mubr.bf16.gmra.mrb[0].mxu0 %v275
    %v311 = vpop.f32.mrb[0].mxu0
    %v312 = vadd.f32 %v260, %v311
    %v313 = vpop.f32.mrb[0].mxu0
    %v314 = vpop.f32.mrb[0].mxu0
    %v315 = vadd.f32 %v260, %v314
    %v316 = vpop.f32.mrb[0].mxu0
    %317 = vdwg.mxu0
    %v318 = vmax.f32 %v312, 0.0
    %v319 = vmax.f32 %v315, 0.0
    %v320 = vpack.c.bf16 %v319, %v318
    %v321 = vld [vmem:[%s7] sm:$0xf]
    %v322 = vld [vmem:[%s7 + $0x4] sm:$0xf]
    %v323 = vld [vmem:[%s7 + $0x8] sm:$0xf]
    %v324 = vld [vmem:[%s7 + $0xc] sm:$0xf]
    %v326 = vlaneseq
    %v327 = vshrl.u32 %v326, 7
    %v328 = vsub.s32 0, %v327
    %v329 = vrot.slane %v86, %v328
    %v335 = vunpack.c.l.b16 %v321
    %v336 = vunpack.c.l.b16 %v322
    %v337 = vunpack.c.l.b16 %v323
    %v338 = vunpack.c.l.b16 %v324
    %v339 = vpack.c.b16 %v336, %v335
    %v340 = vpack.c.b16 %v338, %v337
    %v344 = vsel %vm204, %v320, 0
    %346 = vmatprep.subr.bf16.mxu0 0
    %347 = vmatpush1.bf16.msra.mxu0 %v339
    %348 = vmatprep.subr.bf16.mxu0 0
    %349 = vmatpush1.bf16.msra.mxu0 %v340
    %350 = vmatprep.subr.bf16.mxu0 0
    %351 = vmatpush1.bf16.msra.mxu0 0
    %352 = vmatprep.subr.bf16.mxu0 0
    %353 = vmatpush1.bf16.msra.mxu0 0
    %354 = vmatprep.subr.bf16.mxu0 0
    %355 = vmatpush1.bf16.msra.mxu0 0
    %356 = vmatprep.subr.bf16.mxu0 0
    %357 = vmatpush1.bf16.msra.mxu0 0
    %358 = vmatprep.subr.bf16.mxu0 0
    %359 = vmatpush1.bf16.msra.mxu0 0
    %360 = vmatprep.subr.bf16.mxu0 0
    %361 = vmatpush1.bf16.msra.mxu0 0
    %362 = vmatprep.subr.bf16.mxu0 0
    %363 = vmatpush1.bf16.msra.mxu0 0
    %364 = vmatprep.subr.bf16.mxu0 0
    %365 = vmatpush1.bf16.msra.mxu0 0
    %366 = vmatprep.subr.bf16.mxu0 0
    %367 = vmatpush1.bf16.msra.mxu0 0
    %368 = vmatprep.subr.bf16.mxu0 0
    %369 = vmatpush1.bf16.msra.mxu0 0
    %370 = vmatprep.subr.bf16.mxu0 0
    %371 = vmatpush1.bf16.msra.mxu0 0
    %372 = vmatprep.subr.bf16.mxu0 0
    %373 = vmatpush1.bf16.msra.mxu0 0
    %374 = vmatprep.subr.bf16.mxu0 0
    %375 = vmatpush1.bf16.msra.mxu0 0
    %376 = vmatprep.subr.bf16.mxu0 0
    %377 = vmatpush1.bf16.msra.mxu0 0
    %378 = vmatprep.mubr.bf16.mxu0 0
    %379 = vmatmul.mubr.bf16.gmra.mrb[0].mxu0 %v344
    %v380 = vpop.f32.mrb[0].mxu0
    %v381 = vadd.f32 %v329, %v380
    %v382 = vpop.f32.mrb[0].mxu0
    %v383 = vpop.f32.mrb[0].mxu0
    %v384 = vadd.f32 %v329, %v383
    %v385 = vpop.f32.mrb[0].mxu0
    %386 = vdwg.mxu0
    %v387 = vmax.f32 %v381, 0.0
    %v388 = vmax.f32 %v384, 0.0
    %v389 = vpack.c.bf16 %v388, %v387
    %v390 = vld [vmem:[%s9] sm:$0xf]
    %v391 = vld [vmem:[%s9 + $0x4] sm:$0xf]
    %v392 = vld [vmem:[%s9 + $0x8] sm:$0xf]
    %v393 = vld [vmem:[%s9 + $0xc] sm:$0xf]
    %v395 = vlaneseq
    %v396 = vshrl.u32 %v395, 7
    %v397 = vsub.s32 0, %v396
    %v398 = vrot.slane %v87, %v397
    %v404 = vunpack.c.l.b16 %v390
    %v405 = vunpack.c.l.b16 %v391
    %v406 = vunpack.c.l.b16 %v392
    %v407 = vunpack.c.l.b16 %v393
    %v408 = vpack.c.b16 %v405, %v404
    %v409 = vpack.c.b16 %v407, %v406
    %v413 = vsel %vm204, %v389, 0
    %415 = vmatprep.subr.bf16.mxu0 0
    %416 = vmatpush1.bf16.msra.mxu0 %v408
    %417 = vmatprep.subr.bf16.mxu0 0
    %418 = vmatpush1.bf16.msra.mxu0 %v409
    %419 = vmatprep.subr.bf16.mxu0 0
    %420 = vmatpush1.bf16.msra.mxu0 0
    %421 = vmatprep.subr.bf16.mxu0 0
    %422 = vmatpush1.bf16.msra.mxu0 0
    %423 = vmatprep.subr.bf16.mxu0 0
    %424 = vmatpush1.bf16.msra.mxu0 0
    %425 = vmatprep.subr.bf16.mxu0 0
    %426 = vmatpush1.bf16.msra.mxu0 0
    %427 = vmatprep.subr.bf16.mxu0 0
    %428 = vmatpush1.bf16.msra.mxu0 0
    %429 = vmatprep.subr.bf16.mxu0 0
    %430 = vmatpush1.bf16.msra.mxu0 0
    %431 = vmatprep.subr.bf16.mxu0 0
    %432 = vmatpush1.bf16.msra.mxu0 0
    %433 = vmatprep.subr.bf16.mxu0 0
    %434 = vmatpush1.bf16.msra.mxu0 0
    %435 = vmatprep.subr.bf16.mxu0 0
    %436 = vmatpush1.bf16.msra.mxu0 0
    %437 = vmatprep.subr.bf16.mxu0 0
    %438 = vmatpush1.bf16.msra.mxu0 0
    %439 = vmatprep.subr.bf16.mxu0 0
    %440 = vmatpush1.bf16.msra.mxu0 0
    %441 = vmatprep.subr.bf16.mxu0 0
    %442 = vmatpush1.bf16.msra.mxu0 0
    %443 = vmatprep.subr.bf16.mxu0 0
    %444 = vmatpush1.bf16.msra.mxu0 0
    %445 = vmatprep.subr.bf16.mxu0 0
    %446 = vmatpush1.bf16.msra.mxu0 0
    %447 = vmatprep.mubr.bf16.mxu0 0
    %448 = vmatmul.mubr.bf16.gmra.mrb[0].mxu0 %v413
    %v449 = vpop.f32.mrb[0].mxu0
    %v450 = vadd.f32 %v398, %v449
    %v451 = vpop.f32.mrb[0].mxu0
    %v452 = vpop.f32.mrb[0].mxu0
    %v453 = vadd.f32 %v398, %v452
    %v454 = vpop.f32.mrb[0].mxu0
    %455 = vdwg.mxu0
    %v456 = vadd.f32 %v450, %v318
    %v457 = vadd.f32 %v453, %v319
    %v458 = vmax.f32 %v456, 0.0
    %v459 = vmax.f32 %v457, 0.0
    %v460 = vpack.c.bf16 %v459, %v458
    %v461 = vld [vmem:[%s11] sm:$0xf]
    %v462 = vld [vmem:[%s11 + $0x4] sm:$0xf]
    %v463 = vld [vmem:[%s11 + $0x8] sm:$0xf]
    %v464 = vld [vmem:[%s11 + $0xc] sm:$0xf]
    %v466 = vlaneseq
    %v467 = vshrl.u32 %v466, 7
    %v468 = vsub.s32 0, %v467
    %v469 = vrot.slane %v88, %v468
    %v475 = vunpack.c.l.b16 %v461
    %v476 = vunpack.c.l.b16 %v462
    %v477 = vunpack.c.l.b16 %v463
    %v478 = vunpack.c.l.b16 %v464
    %v479 = vpack.c.b16 %v476, %v475
    %v480 = vpack.c.b16 %v478, %v477
    %v484 = vsel %vm204, %v460, 0
    %486 = vmatprep.subr.bf16.mxu0 0
    %487 = vmatpush1.bf16.msra.mxu0 %v479
    %488 = vmatprep.subr.bf16.mxu0 0
    %489 = vmatpush1.bf16.msra.mxu0 %v480
    %490 = vmatprep.subr.bf16.mxu0 0
    %491 = vmatpush1.bf16.msra.mxu0 0
    %492 = vmatprep.subr.bf16.mxu0 0
    %493 = vmatpush1.bf16.msra.mxu0 0
    %494 = vmatprep.subr.bf16.mxu0 0
    %495 = vmatpush1.bf16.msra.mxu0 0
    %496 = vmatprep.subr.bf16.mxu0 0
    %497 = vmatpush1.bf16.msra.mxu0 0
    %498 = vmatprep.subr.bf16.mxu0 0
    %499 = vmatpush1.bf16.msra.mxu0 0
    %500 = vmatprep.subr.bf16.mxu0 0
    %501 = vmatpush1.bf16.msra.mxu0 0
    %502 = vmatprep.subr.bf16.mxu0 0
    %503 = vmatpush1.bf16.msra.mxu0 0
    %504 = vmatprep.subr.bf16.mxu0 0
    %505 = vmatpush1.bf16.msra.mxu0 0
    %506 = vmatprep.subr.bf16.mxu0 0
    %507 = vmatpush1.bf16.msra.mxu0 0
    %508 = vmatprep.subr.bf16.mxu0 0
    %509 = vmatpush1.bf16.msra.mxu0 0
    %510 = vmatprep.subr.bf16.mxu0 0
    %511 = vmatpush1.bf16.msra.mxu0 0
    %512 = vmatprep.subr.bf16.mxu0 0
    %513 = vmatpush1.bf16.msra.mxu0 0
    %514 = vmatprep.subr.bf16.mxu0 0
    %515 = vmatpush1.bf16.msra.mxu0 0
    %516 = vmatprep.subr.bf16.mxu0 0
    %517 = vmatpush1.bf16.msra.mxu0 0
    %518 = vmatprep.mubr.bf16.mxu0 0
    %519 = vmatmul.mubr.bf16.gmra.mrb[0].mxu0 %v484
    %v520 = vpop.f32.mrb[0].mxu0
    %v521 = vadd.f32 %v469, %v520
    %v522 = vpop.f32.mrb[0].mxu0
    %v523 = vpop.f32.mrb[0].mxu0
    %v524 = vadd.f32 %v469, %v523
    %v525 = vpop.f32.mrb[0].mxu0
    %526 = vdwg.mxu0
    %v527 = vxor.u32 %v521, 2147483648
    %v528 = vxor.u32 %v524, 2147483648
    %v529 = vmul.f32 %v527, 1.442695
    %v530 = vpow.pop %v529
    %v531 = vmul.f32 %v528, 1.442695
    %v532 = vpow.pop %v531
    %v533 = vadd.f32 %v530, 1.0
    %v534 = vadd.f32 %v532, 1.0
    %v535 = vrcp.pop %v533
    %v536 = vmul.f32 1.0, %v535
    %v537 = vrcp.pop %v534
    %v538 = vmul.f32 1.0, %v537
    %539 = vst [vmem:[#allocation8] sm:$0xff] %v536
    %540 = vst [vmem:[#allocation8 + $0x8] sm:$0xff] %v538
    // Predicated region
    $region66: #{tpu_custom_call.1} parent=1 // pred_check
      _
    $region67: #{tpu_custom_call.1} parent=1 // pred_check_branch
      %542 = sbr.rel (0) target = $region69
    $region68: #{tpu_custom_call.1} parent=1 // pred_region
      %s544 = ssub.s32 256, 256
      %545 = vsyncadd [#allocation4], %s544
      %s546 = sshll.u32 [#allocation8], 4
      %s547 = int_to_ptr.vmem [resolvable:$true] %s546
      %552 = dma.vmem_to_hbm [thread:$0]  %s547, 256, %s13, [#allocation4], 128, 128, 8
    $region69: #{tpu_custom_call.1} parent=1 // pred_fallthru
      _
    // Predicated region
    $region70: #{tpu_custom_call.1} parent=1 // pred_check
      _
    $region71: #{tpu_custom_call.1} parent=1 // pred_check_branch
      %554 = sbr.rel (0) target = $region73
    $region72: #{tpu_custom_call.1} parent=1 // pred_region
      %555 = dma.done [#allocation4], 256
    $region73: #{tpu_custom_call.1} parent=1 // pred_fallthru
      _
    %556 = vsyncpa [#allocation3], 1
    %557 = vsyncpa [#allocation6], 1
    %558 = vsyncpa [#allocation4], 1

</llo_original>
